<compile_context>
chip_gen: v5e
topology: v5e:2x2
jax: 0.10.0
libtpu: 0.0.40
codegen_flags: <defaults>
</compile_context>

<pallas_src>
import functools

import numpy as np
import jax
import jax.numpy as jnp
from jax.experimental import pallas as pl
from jax.experimental.pallas import tpu as pltpu

HIDDEN = 32      # config.model.hidden_dim
ORDER = 3        # config.model.order  -> edge_types = order + 1 = 4
N_NODES = 64


def _bce_with_logits(x, y):
    # PyTorch BCEWithLogitsLoss(reduction='none'):
    #   loss = max(x, 0) - x * y + log1p(exp(-|x|))
    return jnp.maximum(x, 0.0) - x * y + jnp.log1p(jnp.exp(-jnp.abs(x)))


# ---------------------------------------------------------------------------
# Fused Pallas kernel:
#   projector (Linear -> SiLU -> Linear) + one-hot MXU gather of edge rows +
#   dot-product scores + BCEWithLogits + masked mean -> scalar loss in SMEM.
# ---------------------------------------------------------------------------
def _edge_pred_kernel(x_ref, w1_ref, b1_ref, w2_ref, b2_ref, idx_ref, loss_ref,
                      *, num_samples, n_nodes):
    # ---- projector: all 64 rows in one MXU block -------------------------
    x = x_ref[...]                                                  # (N, H) f32
    h = jnp.dot(x, w1_ref[...], preferred_element_type=jnp.float32) + b1_ref[...]
    h = h * jax.nn.sigmoid(h)                                       # SiLU, f32
    node_rep = (jnp.dot(h, w2_ref[...], preferred_element_type=jnp.float32)
                + b2_ref[...])                                      # (N, H)

    # ---- in-kernel row gather via one-hot matmuls (node_rep stays in VMEM)
    idx = idx_ref[...]                                              # (S_pad, 4) i32
    s_pad = idx.shape[0]
    iota_n = jax.lax.broadcasted_iota(jnp.int32, (s_pad, n_nodes), 1)

    def gather(col):
        onehot = (iota_n == idx[:, col:col + 1]).astype(jnp.float32)  # (S_pad, N)
        return jnp.dot(onehot, node_rep, preferred_element_type=jnp.float32)

    a_pos, b_pos = gather(0), gather(1)
    a_neg, b_neg = gather(2), gather(3)

    pos_score = jnp.sum(a_pos * b_pos, axis=1, keepdims=True)       # (S_pad, 1)
    neg_score = jnp.sum(a_neg * b_neg, axis=1, keepdims=True)       # (S_pad, 1)

    loss_pos = _bce_with_logits(pos_score, 1.0)
    loss_neg = _bce_with_logits(neg_score, 0.0)

    # Mask padded rows and divide by the TRUE sample count (mean parity).
    row = jax.lax.broadcasted_iota(jnp.int32, (s_pad, 1), 0)
    valid = (row < num_samples).astype(jnp.float32)
    total = jnp.sum((loss_pos + loss_neg) * valid)
    loss_ref[0] = total * (1.0 / float(num_samples))


def edge_pred_fused(x, w1, b1, w2, b2, idx, *, num_samples):
    n, h = x.shape
    s_pad = idx.shape[0]

    flops = (2 * 2 * n * h * h            # projector matmuls
             + 4 * 2 * s_pad * n * h      # one-hot gather matmuls
             + 4 * s_pad * h)             # scores
    transcendentals = n * h + 2 * s_pad   # sigmoid + exp/log1p
    bytes_accessed = 4 * (x.size + w1.size + b1.size + w2.size + b2.size
                          + idx.size + 1)

    kernel = functools.partial(_edge_pred_kernel,
                               num_samples=num_samples, n_nodes=n)
    out = pl.pallas_call(
        kernel,
        out_shape=jax.ShapeDtypeStruct((1,), jnp.float32),
        in_specs=[
            pl.BlockSpec(memory_space=pltpu.VMEM),   # x (N, H)
            pl.BlockSpec(memory_space=pltpu.VMEM),   # w1 (H, H)
            pl.BlockSpec(memory_space=pltpu.VMEM),   # b1 (1, H)
            pl.BlockSpec(memory_space=pltpu.VMEM),   # w2 (H, H)
            pl.BlockSpec(memory_space=pltpu.VMEM),   # b2 (1, H)
            pl.BlockSpec(memory_space=pltpu.VMEM),   # idx (S_pad, 4) int32
        ],
        out_specs=pl.BlockSpec(memory_space=pltpu.SMEM),   # scalar loss
        cost_estimate=pl.CostEstimate(flops=flops,
                                      transcendentals=transcendentals,
                                      bytes_accessed=bytes_accessed),
    )(x, w1, b1, w2, b2, idx)
    return out[0]


# ---------------------------------------------------------------------------
# EdgePred forward (glue in plain JAX / numpy)
# ---------------------------------------------------------------------------
def gen_edge_onehot(edge_type, edge_types):
    if not edge_types:
        return None
    return jax.nn.one_hot(edge_type, edge_types, dtype=jnp.float32)


def edge_pred_forward(params, node_feature, pos, edge_index, edge_type,
                      edge_pos, edge_neg, pos_sample, neg_sample):
    edge_attr = gen_edge_onehot(jnp.asarray(edge_type), ORDER + 1)  # noqa: F841
    # TODO(synk): rep_model is an external representation model injected into
    # EdgePred; stand in with identity (pred_fea = node_feature, pred_pos = pos).
    pred_fea = node_feature

    num_samples = int(pos_sample.shape[0])
    s_pad = max(8, ((num_samples + 7) // 8) * 8)    # pad to a sublane multiple

    # (S_pad, 4) index table: [a_pos, b_pos, a_neg, b_neg], zero-padded rows.
    idx = jnp.stack([edge_pos[0, pos_sample], edge_pos[1, pos_sample],
                     edge_neg[0, neg_sample], edge_neg[1, neg_sample]],
                    axis=1).astype(jnp.int32)
    idx = jnp.pad(idx, ((0, s_pad - num_samples), (0, 0)))

    return edge_pred_fused(pred_fea, params["w1"], params["b1"],
                           params["w2"], params["b2"], idx,
                           num_samples=num_samples)


def edge_pred_reference(params, node_feature, edge_pos, edge_neg,
                        pos_sample, neg_sample):
    """Pure-JAX reference for correctness check."""
    h = node_feature @ params["w1"] + params["b1"]
    h = h * jax.nn.sigmoid(h)
    node_rep = h @ params["w2"] + params["b2"]
    pos_score = jnp.sum(node_rep[edge_pos[0, pos_sample]] *
                        node_rep[edge_pos[1, pos_sample]], axis=1)
    neg_score = jnp.sum(node_rep[edge_neg[0, neg_sample]] *
                        node_rep[edge_neg[1, neg_sample]], axis=1)
    loss_pos = _bce_with_logits(pos_score, jnp.ones_like(pos_score))
    loss_neg = _bce_with_logits(neg_score, jnp.zeros_like(neg_score))
    return loss_pos.mean() + loss_neg.mean()


if __name__ == "__main__":
    key = jax.random.PRNGKey(0)
    k1, k2, k3, k4 = jax.random.split(key, 4)

    # projector parameters: nn.Linear(H,H), SiLU, nn.Linear(H,H)
    scale = 1.0 / np.sqrt(HIDDEN)
    params = {
        "w1": jax.random.uniform(k1, (HIDDEN, HIDDEN), jnp.float32, -scale, scale),
        "b1": jnp.zeros((1, HIDDEN), jnp.float32),
        "w2": jax.random.uniform(k2, (HIDDEN, HIDDEN), jnp.float32, -scale, scale),
        "b2": jnp.zeros((1, HIDDEN), jnp.float32),
    }

    node_feature = jax.random.normal(k3, (N_NODES, HIDDEN), jnp.float32)
    pos = jax.random.normal(k4, (N_NODES, 3), jnp.float32)

    # Deterministic synthetic molecular-like graph:
    #   type-1 edges = bonds (i, i+1); type-2 edges = 2-hop (i, i+2).
    s1 = np.arange(N_NODES - 1)
    e1 = np.stack([np.concatenate([s1, s1 + 1]), np.concatenate([s1 + 1, s1])])
    s2 = np.arange(N_NODES - 2)
    e2 = np.stack([np.concatenate([s2, s2 + 2]), np.concatenate([s2 + 2, s2])])
    edge_index = np.concatenate([e1, e2], axis=1).astype(np.int32)     # (2, 250)
    edge_type = np.concatenate([np.full(e1.shape[1], 1),
                                np.full(e2.shape[1], 2)]).astype(np.int32)

    edge_pos = edge_index[:, edge_type == 1]
    edge_neg = edge_index[:, edge_type != 1]
    num_samples = edge_pos.shape[-1] // 2
    rng = np.random.RandomState(0)      # deterministic stand-in for torch.randperm
    pos_sample = rng.permutation(edge_pos.shape[-1])[:num_samples]
    neg_sample = rng.permutation(edge_neg.shape[-1])[:num_samples]

    loss = edge_pred_forward(params, node_feature, pos, edge_index, edge_type,
                             jnp.asarray(edge_pos), jnp.asarray(edge_neg),
                             jnp.asarray(pos_sample), jnp.asarray(neg_sample))
    loss = jax.block_until_ready(loss)

    ref = edge_pred_reference(params, node_feature,
                              jnp.asarray(edge_pos), jnp.asarray(edge_neg),
                              jnp.asarray(pos_sample), jnp.asarray(neg_sample))
    np.testing.assert_allclose(np.asarray(loss), np.asarray(ref),
                               rtol=1e-2, atol=1e-2)
    print("KERNEL_OK")
</pallas_src>

<mosaic_0001>
module attributes {stable_mosaic.version = 11 : i64} {
  func.func @_edge_pred_kernel(%arg0: memref<64x32xf32, #tpu.memory_space<vmem>>, %arg1: memref<32x32xf32, #tpu.memory_space<vmem>>, %arg2: memref<1x32xf32, #tpu.memory_space<vmem>>, %arg3: memref<32x32xf32, #tpu.memory_space<vmem>>, %arg4: memref<1x32xf32, #tpu.memory_space<vmem>>, %arg5: memref<64x4xi32, #tpu.memory_space<vmem>>, %arg6: memref<1xf32, #tpu.memory_space<smem>>) attributes {dimension_semantics = [], scalar_prefetch = 0 : i64, scratch_operands = 0 : i64, tpu.core_type = #tpu.core_type<tc>} {
    %c0 = arith.constant 0 : index
    %c0_0 = arith.constant 0 : index
    %0 = vector.load %arg0[%c0, %c0_0] : memref<64x32xf32, #tpu.memory_space<vmem>>, vector<64x32xf32>
    %c0_1 = arith.constant 0 : index
    %c0_2 = arith.constant 0 : index
    %1 = vector.load %arg1[%c0_1, %c0_2] : memref<32x32xf32, #tpu.memory_space<vmem>>, vector<32x32xf32>
    %cst = arith.constant dense<0.000000e+00> : vector<64x32xf32>
    %2 = tpu.matmul %0, %1, %cst {dimension_numbers = #tpu.dot_dimension_numbers<[1], [0], [0], [1], [0, 0, 1, 1], [], []>} : vector<64x32xf32>, vector<32x32xf32>, vector<64x32xf32> -> vector<64x32xf32>
    %c0_3 = arith.constant 0 : index
    %c0_4 = arith.constant 0 : index
    %3 = vector.load %arg2[%c0_3, %c0_4] : memref<1x32xf32, #tpu.memory_space<vmem>>, vector<1x32xf32>
    %4 = vector.broadcast %3 : vector<1x32xf32> to vector<64x32xf32>
    %5 = arith.addf %2, %4 : vector<64x32xf32>
    %6 = arith.negf %5 : vector<64x32xf32>
    %7 = math.exp %6 : vector<64x32xf32>
    %cst_5 = arith.constant 1.000000e+00 : f32
    %8 = vector.broadcast %cst_5 : f32 to vector<64x32xf32>
    %9 = arith.addf %8, %7 : vector<64x32xf32>
    %10 = arith.divf %8, %9 : vector<64x32xf32>
    %11 = arith.mulf %5, %10 : vector<64x32xf32>
    %c0_6 = arith.constant 0 : index
    %c0_7 = arith.constant 0 : index
    %12 = vector.load %arg3[%c0_6, %c0_7] : memref<32x32xf32, #tpu.memory_space<vmem>>, vector<32x32xf32>
    %cst_8 = arith.constant dense<0.000000e+00> : vector<64x32xf32>
    %13 = tpu.matmul %11, %12, %cst_8 {dimension_numbers = #tpu.dot_dimension_numbers<[1], [0], [0], [1], [0, 0, 1, 1], [], []>} : vector<64x32xf32>, vector<32x32xf32>, vector<64x32xf32> -> vector<64x32xf32>
    %c0_9 = arith.constant 0 : index
    %c0_10 = arith.constant 0 : index
    %14 = vector.load %arg4[%c0_9, %c0_10] : memref<1x32xf32, #tpu.memory_space<vmem>>, vector<1x32xf32>
    %15 = vector.broadcast %14 : vector<1x32xf32> to vector<64x32xf32>
    %16 = arith.addf %13, %15 : vector<64x32xf32>
    %c0_11 = arith.constant 0 : index
    %c0_12 = arith.constant 0 : index
    %17 = vector.load %arg5[%c0_11, %c0_12] : memref<64x4xi32, #tpu.memory_space<vmem>>, vector<64x4xi32>
    %18 = tpu.iota {dimensions = array<i32: 1>} : vector<64x64xi32>
    %19 = vector.extract_strided_slice %17 {offsets = [0, 0], sizes = [64, 1], strides = [1, 1]} : vector<64x4xi32> to vector<64x1xi32>
    %20 = vector.broadcast %19 : vector<64x1xi32> to vector<64x64xi32>
    %21 = arith.cmpi eq, %18, %20 : vector<64x64xi32>
    %22 = arith.extui %21 : vector<64x64xi1> to vector<64x64xi32>
    %23 = arith.sitofp %22 : vector<64x64xi32> to vector<64x64xf32>
    %cst_13 = arith.constant dense<0.000000e+00> : vector<64x32xf32>
    %24 = tpu.matmul %23, %16, %cst_13 {dimension_numbers = #tpu.dot_dimension_numbers<[1], [0], [0], [1], [0, 0, 1, 1], [], []>} : vector<64x64xf32>, vector<64x32xf32>, vector<64x32xf32> -> vector<64x32xf32>
    %25 = vector.extract_strided_slice %17 {offsets = [0, 1], sizes = [64, 1], strides = [1, 1]} : vector<64x4xi32> to vector<64x1xi32>
    %26 = vector.broadcast %25 : vector<64x1xi32> to vector<64x64xi32>
    %27 = arith.cmpi eq, %18, %26 : vector<64x64xi32>
    %28 = arith.extui %27 : vector<64x64xi1> to vector<64x64xi32>
    %29 = arith.sitofp %28 : vector<64x64xi32> to vector<64x64xf32>
    %cst_14 = arith.constant dense<0.000000e+00> : vector<64x32xf32>
    %30 = tpu.matmul %29, %16, %cst_14 {dimension_numbers = #tpu.dot_dimension_numbers<[1], [0], [0], [1], [0, 0, 1, 1], [], []>} : vector<64x64xf32>, vector<64x32xf32>, vector<64x32xf32> -> vector<64x32xf32>
    %31 = vector.extract_strided_slice %17 {offsets = [0, 2], sizes = [64, 1], strides = [1, 1]} : vector<64x4xi32> to vector<64x1xi32>
    %32 = vector.broadcast %31 : vector<64x1xi32> to vector<64x64xi32>
    %33 = arith.cmpi eq, %18, %32 : vector<64x64xi32>
    %34 = arith.extui %33 : vector<64x64xi1> to vector<64x64xi32>
    %35 = arith.sitofp %34 : vector<64x64xi32> to vector<64x64xf32>
    %cst_15 = arith.constant dense<0.000000e+00> : vector<64x32xf32>
    %36 = tpu.matmul %35, %16, %cst_15 {dimension_numbers = #tpu.dot_dimension_numbers<[1], [0], [0], [1], [0, 0, 1, 1], [], []>} : vector<64x64xf32>, vector<64x32xf32>, vector<64x32xf32> -> vector<64x32xf32>
    %37 = vector.extract_strided_slice %17 {offsets = [0, 3], sizes = [64, 1], strides = [1, 1]} : vector<64x4xi32> to vector<64x1xi32>
    %38 = vector.broadcast %37 : vector<64x1xi32> to vector<64x64xi32>
    %39 = arith.cmpi eq, %18, %38 : vector<64x64xi32>
    %40 = arith.extui %39 : vector<64x64xi1> to vector<64x64xi32>
    %41 = arith.sitofp %40 : vector<64x64xi32> to vector<64x64xf32>
    %cst_16 = arith.constant dense<0.000000e+00> : vector<64x32xf32>
    %42 = tpu.matmul %41, %16, %cst_16 {dimension_numbers = #tpu.dot_dimension_numbers<[1], [0], [0], [1], [0, 0, 1, 1], [], []>} : vector<64x64xf32>, vector<64x32xf32>, vector<64x32xf32> -> vector<64x32xf32>
    %43 = arith.mulf %24, %30 : vector<64x32xf32>
    %cst_17 = arith.constant dense<0.000000e+00> : vector<64xf32>
    %44 = vector.multi_reduction <add>, %43, %cst_17 [1] : vector<64x32xf32> to vector<64xf32>
    %45 = vector.shape_cast %44 : vector<64xf32> to vector<64x1xf32>
    %46 = arith.mulf %36, %42 : vector<64x32xf32>
    %cst_18 = arith.constant dense<0.000000e+00> : vector<64xf32>
    %47 = vector.multi_reduction <add>, %46, %cst_18 [1] : vector<64x32xf32> to vector<64xf32>
    %48 = vector.shape_cast %47 : vector<64xf32> to vector<64x1xf32>
    %cst_19 = arith.constant 0.000000e+00 : f32
    %49 = vector.broadcast %cst_19 : f32 to vector<64x1xf32>
    %50 = arith.maximumf %45, %49 : vector<64x1xf32>
    %cst_20 = arith.constant 1.000000e+00 : f32
    %51 = vector.broadcast %cst_20 : f32 to vector<64x1xf32>
    %52 = arith.mulf %45, %51 : vector<64x1xf32>
    %53 = arith.subf %50, %52 : vector<64x1xf32>
    %54 = math.absf %45 : vector<64x1xf32>
    %cst_21 = arith.constant 0.000000e+00 : f32
    %55 = vector.broadcast %cst_21 : f32 to vector<64x1xf32>
    %56 = arith.subf %55, %54 : vector<64x1xf32>
    %57 = math.exp %56 : vector<64x1xf32>
    %58 = math.log1p %57 : vector<64x1xf32>
    %59 = arith.addf %53, %58 : vector<64x1xf32>
    %cst_22 = arith.constant 0.000000e+00 : f32
    %60 = vector.broadcast %cst_22 : f32 to vector<64x1xf32>
    %61 = arith.maximumf %48, %60 : vector<64x1xf32>
    %cst_23 = arith.constant 0.000000e+00 : f32
    %62 = vector.broadcast %cst_23 : f32 to vector<64x1xf32>
    %63 = arith.mulf %48, %62 : vector<64x1xf32>
    %64 = arith.subf %61, %63 : vector<64x1xf32>
    %65 = math.absf %48 : vector<64x1xf32>
    %cst_24 = arith.constant 0.000000e+00 : f32
    %66 = vector.broadcast %cst_24 : f32 to vector<64x1xf32>
    %67 = arith.subf %66, %65 : vector<64x1xf32>
    %68 = math.exp %67 : vector<64x1xf32>
    %69 = math.log1p %68 : vector<64x1xf32>
    %70 = arith.addf %64, %69 : vector<64x1xf32>
    %71 = tpu.iota {dimensions = array<i32: 0>} : vector<64x1xi32>
    %c63_i32 = arith.constant 63 : i32
    %72 = vector.broadcast %c63_i32 : i32 to vector<64x1xi32>
    %73 = arith.cmpi slt, %71, %72 : vector<64x1xi32>
    %74 = arith.extui %73 : vector<64x1xi1> to vector<64x1xi32>
    %75 = arith.sitofp %74 : vector<64x1xi32> to vector<64x1xf32>
    %76 = arith.addf %59, %70 : vector<64x1xf32>
    %77 = arith.mulf %76, %75 : vector<64x1xf32>
    %78 = vector.shape_cast %77 : vector<64x1xf32> to vector<1x64x1xf32>
    %cst_25 = arith.constant dense<0.000000e+00> : vector<1xf32>
    %79 = vector.multi_reduction <add>, %78, %cst_25 [1, 2] : vector<1x64x1xf32> to vector<1xf32>
    %80 = vector.shape_cast %79 : vector<1xf32> to vector<1x1x1xf32>
    %81 = vector.extract %80[0, 0, 0] : f32 from vector<1x1x1xf32>
    %cst_26 = arith.constant 0.0158730168 : f32
    %82 = arith.mulf %81, %cst_26 : f32
    %c0_27 = arith.constant 0 : index
    %83 = memref.load %arg6[%c0_27] : memref<1xf32, #tpu.memory_space<smem>>
    memref.store %82, %arg6[%c0_27] : memref<1xf32, #tpu.memory_space<smem>>
    return
  }
}

</mosaic_0001>

<llo_original>
// kernel: tpu_custom_call.1
$region0: #{tpu_custom_call.1}
  #allocation0 [shape = 'u32[]', space=smem, size = 0x4, offset = 0x4, fixed_abs, tag = 'smem constant byte address 0x4 - core index']
  #allocation1 [shape = 'u32[72,128]{1,0:T(1,128)}', space=vmem, size = 0x9000, scoped, tag = 'internal scratch']
  %s0 = inlined_call_operand.vmem [shape: f32[64,32], index: 0, kind: input, shape index: {}]
  %s1 = inlined_call_operand.vmem [shape: f32[32,32], index: 1, kind: input, shape index: {}]
  %s2 = inlined_call_operand.vmem [shape: f32[1,32], index: 2, kind: input, shape index: {}]
  %s3 = inlined_call_operand.vmem [shape: f32[32,32], index: 3, kind: input, shape index: {}]
  %s4 = inlined_call_operand.vmem [shape: f32[1,32], index: 4, kind: input, shape index: {}]
  %s5 = inlined_call_operand.vmem [shape: s32[64,4], index: 5, kind: input, shape index: {}]
  %s6 = inlined_call_operand.hbm [shape: f32[1], index: 6, kind: output, shape index: {}]
  %s7 = sld [smem:[#allocation0]]
  $region34: #{tpu_custom_call.1} parent=0
    _
  %s9 = ssub.s32 1, %s7
  %s10 = scalar_select 0, %s9, %s7
  $region1: #{tpu_custom_call.1} parent=0
    #allocation2 [shape = 'u8[512]{0}', space=smem, size = 0x200, scoped, tag = 'output window, operand 0, single buffered']
    #allocation3 [shape = 's32[1]{0}', space=sflag, size = 0x4, scoped, tag = 'scoped memory for tpu_custom_call.1']
    %11 = vsyncpa [#allocation3], 0
    // Predicated region
    $region2: #{tpu_custom_call.1} parent=1 // pred_check
      _
    $region3: #{tpu_custom_call.1} parent=1 // pred_check_branch
      %13 = sbr.rel (0) target = $region5
    $region4: #{tpu_custom_call.1} parent=1 // pred_region
      _
    $region5: #{tpu_custom_call.1} parent=1 // pred_fallthru
      _
    // Predicated region
    $region6: #{tpu_custom_call.1} parent=1 // pred_check
      _
    $region7: #{tpu_custom_call.1} parent=1 // pred_check_branch
      %15 = sbr.rel (0) target = $region9
    $region8: #{tpu_custom_call.1} parent=1 // pred_region
      _
    $region9: #{tpu_custom_call.1} parent=1 // pred_fallthru
      _
    // Predicated region
    $region10: #{tpu_custom_call.1} parent=1 // pred_check
      _
    $region11: #{tpu_custom_call.1} parent=1 // pred_check_branch
      %17 = sbr.rel (0) target = $region13
    $region12: #{tpu_custom_call.1} parent=1 // pred_region
      _
    $region13: #{tpu_custom_call.1} parent=1 // pred_fallthru
      _
    // Predicated region
    $region14: #{tpu_custom_call.1} parent=1 // pred_check
      _
    $region15: #{tpu_custom_call.1} parent=1 // pred_check_branch
      %19 = sbr.rel (0) target = $region17
    $region16: #{tpu_custom_call.1} parent=1 // pred_region
      _
    $region17: #{tpu_custom_call.1} parent=1 // pred_fallthru
      _
    // Predicated region
    $region18: #{tpu_custom_call.1} parent=1 // pred_check
      _
    $region19: #{tpu_custom_call.1} parent=1 // pred_check_branch
      %21 = sbr.rel (0) target = $region21
    $region20: #{tpu_custom_call.1} parent=1 // pred_region
      _
    $region21: #{tpu_custom_call.1} parent=1 // pred_fallthru
      _
    // Predicated region
    $region22: #{tpu_custom_call.1} parent=1 // pred_check
      _
    $region23: #{tpu_custom_call.1} parent=1 // pred_check_branch
      %23 = sbr.rel (0) target = $region25
    $region24: #{tpu_custom_call.1} parent=1 // pred_region
      _
    $region25: #{tpu_custom_call.1} parent=1 // pred_fallthru
      _
    %v24 = vld [vmem:[%s0] sm:$0xff]
    %v25 = vld [vmem:[%s0 + $0x8] sm:$0xff]
    %v26 = vld [vmem:[%s0 + $0x10] sm:$0xff]
    %v27 = vld [vmem:[%s0 + $0x18] sm:$0xff]
    %v28 = vld [vmem:[%s0 + $0x20] sm:$0xff]
    %v29 = vld [vmem:[%s0 + $0x28] sm:$0xff]
    %v30 = vld [vmem:[%s0 + $0x30] sm:$0xff]
    %v31 = vld [vmem:[%s0 + $0x38] sm:$0xff]
    %v32 = vld [vmem:[%s1] sm:$0xff]
    %v33 = vld [vmem:[%s1 + $0x8] sm:$0xff]
    %v34 = vld [vmem:[%s1 + $0x10] sm:$0xff]
    %v35 = vld [vmem:[%s1 + $0x18] sm:$0xff]
    %v36 = vld [vmem:[%s2] sm:$0x1]
    %v38 = vperm.slane %v36, 0
    %vm40 = vcmask 261120
    %v42 = vsel %vm40, %v24, 0
    %v45 = vsel %vm40, %v25, 0
    %v48 = vsel %vm40, %v26, 0
    %v51 = vsel %vm40, %v27, 0
    %v54 = vsel %vm40, %v28, 0
    %v57 = vsel %vm40, %v29, 0
    %v60 = vsel %vm40, %v30, 0
    %v63 = vsel %vm40, %v31, 0
    %65 = vmatpush.msra.mxu0 0.0
    %66 = vmatpush.msra.mxu0 0.0
    %67 = vmatpush.msra.mxu0 0.0
    %68 = vmatpush.msra.mxu0 0.0
    %69 = vmatpush.msra.mxu0 0.0
    %70 = vmatpush.msra.mxu0 0.0
    %71 = vmatpush.msra.mxu0 0.0
    %72 = vmatpush.msra.mxu0 0.0
    %73 = vmatpush.msra.mxu0 0.0
    %74 = vmatpush.msra.mxu0 0.0
    %75 = vmatpush.msra.mxu0 0.0
    %76 = vmatpush.msra.mxu0 0.0
    %77 = vmatpush.msra.mxu0 %v35
    %78 = vmatpush.msra.mxu0 %v34
    %79 = vmatpush.msra.mxu0 %v33
    %80 = vmatpush.msra.mxu0 %v32
    %81 = vmatmul.f32.gmra.mxu0 %v42
    %v82 = vpop.f32.mrf.mxu0
    %v83 = vadd.f32 %v38, %v82
    %84 = vmatmul.f32.gmra.mxu0 %v45
    %v85 = vpop.f32.mrf.mxu0
    %v86 = vadd.f32 %v38, %v85
    %87 = vmatmul.f32.gmra.mxu0 %v48
    %v88 = vpop.f32.mrf.mxu0
    %v89 = vadd.f32 %v38, %v88
    %90 = vmatmul.f32.gmra.mxu0 %v51
    %v91 = vpop.f32.mrf.mxu0
    %v92 = vadd.f32 %v38, %v91
    %93 = vmatmul.f32.gmra.mxu0 %v54
    %v94 = vpop.f32.mrf.mxu0
    %v95 = vadd.f32 %v38, %v94
    %96 = vmatmul.f32.gmra.mxu0 %v57
    %v97 = vpop.f32.mrf.mxu0
    %v98 = vadd.f32 %v38, %v97
    %99 = vmatmul.f32.gmra.mxu0 %v60
    %v100 = vpop.f32.mrf.mxu0
    %v101 = vadd.f32 %v38, %v100
    %102 = vmatmul.f32.gmra.mxu0 %v63
    %v103 = vpop.f32.mrf.mxu0
    %v104 = vadd.f32 %v38, %v103
    %105 = vdwg.mxu0
    %v106 = vxor.u32 %v83, 2147483648
    %v107 = vxor.u32 %v86, 2147483648
    %v108 = vxor.u32 %v89, 2147483648
    %v109 = vxor.u32 %v92, 2147483648
    %v110 = vxor.u32 %v95, 2147483648
    %v111 = vxor.u32 %v98, 2147483648
    %v112 = vxor.u32 %v101, 2147483648
    %v113 = vxor.u32 %v104, 2147483648
    %v114 = vmul.f32 %v106, 1.442695
    %v115 = vpow.pop %v114
    %v116 = vmul.f32 %v107, 1.442695
    %v117 = vpow.pop %v116
    %v118 = vmul.f32 %v108, 1.442695
    %v119 = vpow.pop %v118
    %v120 = vmul.f32 %v109, 1.442695
    %v121 = vpow.pop %v120
    %v122 = vmul.f32 %v110, 1.442695
    %v123 = vpow.pop %v122
    %v124 = vmul.f32 %v111, 1.442695
    %v125 = vpow.pop %v124
    %v126 = vmul.f32 %v112, 1.442695
    %v127 = vpow.pop %v126
    %v128 = vmul.f32 %v113, 1.442695
    %v129 = vpow.pop %v128
    %v130 = vadd.f32 %v115, 1.0
    %v131 = vadd.f32 %v117, 1.0
    %v132 = vadd.f32 %v119, 1.0
    %v133 = vadd.f32 %v121, 1.0
    %v134 = vadd.f32 %v123, 1.0
    %v135 = vadd.f32 %v125, 1.0
    %v136 = vadd.f32 %v127, 1.0
    %v137 = vadd.f32 %v129, 1.0
    %v138 = vrcp.pop %v130
    %v139 = vmul.f32 %v130, %v138
    %v140 = vsub.f32 1.0, %v139
    %v141 = vmul.f32 %v138, %v140
    %v142 = vadd.f32 %v138, %v141
    %vm143 = vweird.f32 %v130
    %vm144 = vweird.f32 %v138
    %vm145 = vmor %vm143, %vm144
    %v146 = vsel %vm145, %v138, %v142
    %v147 = vand.u32 2147483647, %v130
    %vm148 = vcmp.eq.f32.partialorder %v147, 8.507059e+37
    %v149 = vand.u32 %v130, 2147483648
    %v150 = vor.u32 1.1754944e-38, %v149
    %v151 = vsel %vm148, %v150, %v146
    %v152 = vmul.f32 1.0, %v151
    %v153 = vrcp.pop %v131
    %v154 = vmul.f32 %v131, %v153
    %v155 = vsub.f32 1.0, %v154
    %v156 = vmul.f32 %v153, %v155
    %v157 = vadd.f32 %v153, %v156
    %vm158 = vweird.f32 %v131
    %vm159 = vweird.f32 %v153
    %vm160 = vmor %vm158, %vm159
    %v161 = vsel %vm160, %v153, %v157
    %v162 = vand.u32 2147483647, %v131
    %vm163 = vcmp.eq.f32.partialorder %v162, 8.507059e+37
    %v164 = vand.u32 %v131, 2147483648
    %v165 = vor.u32 1.1754944e-38, %v164
    %v166 = vsel %vm163, %v165, %v161
    %v167 = vmul.f32 1.0, %v166
    %v168 = vrcp.pop %v132
    %v169 = vmul.f32 %v132, %v168
    %v170 = vsub.f32 1.0, %v169
    %v171 = vmul.f32 %v168, %v170
    %v172 = vadd.f32 %v168, %v171
    %vm173 = vweird.f32 %v132
    %vm174 = vweird.f32 %v168
    %vm175 = vmor %vm173, %vm174
    %v176 = vsel %vm175, %v168, %v172
    %v177 = vand.u32 2147483647, %v132
    %vm178 = vcmp.eq.f32.partialorder %v177, 8.507059e+37
    %v179 = vand.u32 %v132, 2147483648
    %v180 = vor.u32 1.1754944e-38, %v179
    %v181 = vsel %vm178, %v180, %v176
    %v182 = vmul.f32 1.0, %v181
    %v183 = vrcp.pop %v133
    %v184 = vmul.f32 %v133, %v183
    %v185 = vsub.f32 1.0, %v184
    %v186 = vmul.f32 %v183, %v185
    %v187 = vadd.f32 %v183, %v186
    %vm188 = vweird.f32 %v133
    %vm189 = vweird.f32 %v183
    %vm190 = vmor %vm188, %vm189
    %v191 = vsel %vm190, %v183, %v187
    %v192 = vand.u32 2147483647, %v133
    %vm193 = vcmp.eq.f32.partialorder %v192, 8.507059e+37
    %v194 = vand.u32 %v133, 2147483648
    %v195 = vor.u32 1.1754944e-38, %v194
    %v196 = vsel %vm193, %v195, %v191
    %v197 = vmul.f32 1.0, %v196
    %v198 = vrcp.pop %v134
    %v199 = vmul.f32 %v134, %v198
    %v200 = vsub.f32 1.0, %v199
    %v201 = vmul.f32 %v198, %v200
    %v202 = vadd.f32 %v198, %v201
    %vm203 = vweird.f32 %v134
    %vm204 = vweird.f32 %v198
    %vm205 = vmor %vm203, %vm204
    %v206 = vsel %vm205, %v198, %v202
    %v207 = vand.u32 2147483647, %v134
    %vm208 = vcmp.eq.f32.partialorder %v207, 8.507059e+37
    %v209 = vand.u32 %v134, 2147483648
    %v210 = vor.u32 1.1754944e-38, %v209
    %v211 = vsel %vm208, %v210, %v206
    %v212 = vmul.f32 1.0, %v211
    %v213 = vrcp.pop %v135
    %v214 = vmul.f32 %v135, %v213
    %v215 = vsub.f32 1.0, %v214
    %v216 = vmul.f32 %v213, %v215
    %v217 = vadd.f32 %v213, %v216
    %vm218 = vweird.f32 %v135
    %vm219 = vweird.f32 %v213
    %vm220 = vmor %vm218, %vm219
    %v221 = vsel %vm220, %v213, %v217
    %v222 = vand.u32 2147483647, %v135
    %vm223 = vcmp.eq.f32.partialorder %v222, 8.507059e+37
    %v224 = vand.u32 %v135, 2147483648
    %v225 = vor.u32 1.1754944e-38, %v224
    %v226 = vsel %vm223, %v225, %v221
    %v227 = vmul.f32 1.0, %v226
    %v228 = vrcp.pop %v136
    %v229 = vmul.f32 %v136, %v228
    %v230 = vsub.f32 1.0, %v229
    %v231 = vmul.f32 %v228, %v230
    %v232 = vadd.f32 %v228, %v231
    %vm233 = vweird.f32 %v136
    %vm234 = vweird.f32 %v228
    %vm235 = vmor %vm233, %vm234
    %v236 = vsel %vm235, %v228, %v232
    %v237 = vand.u32 2147483647, %v136
    %vm238 = vcmp.eq.f32.partialorder %v237, 8.507059e+37
    %v239 = vand.u32 %v136, 2147483648
    %v240 = vor.u32 1.1754944e-38, %v239
    %v241 = vsel %vm238, %v240, %v236
    %v242 = vmul.f32 1.0, %v241
    %v243 = vrcp.pop %v137
    %v244 = vmul.f32 %v137, %v243
    %v245 = vsub.f32 1.0, %v244
    %v246 = vmul.f32 %v243, %v245
    %v247 = vadd.f32 %v243, %v246
    %vm248 = vweird.f32 %v137
    %vm249 = vweird.f32 %v243
    %vm250 = vmor %vm248, %vm249
    %v251 = vsel %vm250, %v243, %v247
    %v252 = vand.u32 2147483647, %v137
    %vm253 = vcmp.eq.f32.partialorder %v252, 8.507059e+37
    %v254 = vand.u32 %v137, 2147483648
    %v255 = vor.u32 1.1754944e-38, %v254
    %v256 = vsel %vm253, %v255, %v251
    %v257 = vmul.f32 1.0, %v256
    %v258 = vmul.f32 %v83, %v152
    %v259 = vmul.f32 %v86, %v167
    %v260 = vmul.f32 %v89, %v182
    %v261 = vmul.f32 %v92, %v197
    %v262 = vmul.f32 %v95, %v212
    %v263 = vmul.f32 %v98, %v227
    %v264 = vmul.f32 %v101, %v242
    %v265 = vmul.f32 %v104, %v257
    %v266 = vld [vmem:[%s3] sm:$0xff]
    %v267 = vld [vmem:[%s3 + $0x8] sm:$0xff]
    %v268 = vld [vmem:[%s3 + $0x10] sm:$0xff]
    %v269 = vld [vmem:[%s3 + $0x18] sm:$0xff]
    %v270 = vld [vmem:[%s4] sm:$0x1]
    %v272 = vperm.slane %v270, 0
    %v275 = vsel %vm40, %v258, 0
    %v278 = vsel %vm40, %v259, 0
    %v281 = vsel %vm40, %v260, 0
    %v284 = vsel %vm40, %v261, 0
    %v287 = vsel %vm40, %v262, 0
    %v290 = vsel %vm40, %v263, 0
    %v293 = vsel %vm40, %v264, 0
    %v296 = vsel %vm40, %v265, 0
    %298 = vmatpush.msra.mxu0 0.0
    %299 = vmatpush.msra.mxu0 0.0
    %300 = vmatpush.msra.mxu0 0.0
    %301 = vmatpush.msra.mxu0 0.0
    %302 = vmatpush.msra.mxu0 0.0
    %303 = vmatpush.msra.mxu0 0.0
    %304 = vmatpush.msra.mxu0 0.0
    %305 = vmatpush.msra.mxu0 0.0
    %306 = vmatpush.msra.mxu0 0.0
    %307 = vmatpush.msra.mxu0 0.0
    %308 = vmatpush.msra.mxu0 0.0
    %309 = vmatpush.msra.mxu0 0.0
    %310 = vmatpush.msra.mxu0 %v269
    %311 = vmatpush.msra.mxu0 %v268
    %312 = vmatpush.msra.mxu0 %v267
    %313 = vmatpush.msra.mxu0 %v266
    %314 = vmatmul.f32.gmra.mxu0 %v275
    %v315 = vpop.f32.mrf.mxu0
    %v316 = vadd.f32 %v272, %v315
    %317 = vmatmul.f32.gmra.mxu0 %v278
    %v318 = vpop.f32.mrf.mxu0
    %v319 = vadd.f32 %v272, %v318
    %320 = vmatmul.f32.gmra.mxu0 %v281
    %v321 = vpop.f32.mrf.mxu0
    %v322 = vadd.f32 %v272, %v321
    %323 = vmatmul.f32.gmra.mxu0 %v284
    %v324 = vpop.f32.mrf.mxu0
    %v325 = vadd.f32 %v272, %v324
    %326 = vmatmul.f32.gmra.mxu0 %v287
    %v327 = vpop.f32.mrf.mxu0
    %v328 = vadd.f32 %v272, %v327
    %329 = vmatmul.f32.gmra.mxu0 %v290
    %v330 = vpop.f32.mrf.mxu0
    %v331 = vadd.f32 %v272, %v330
    %332 = vmatmul.f32.gmra.mxu0 %v293
    %v333 = vpop.f32.mrf.mxu0
    %v334 = vadd.f32 %v272, %v333
    %335 = vmatmul.f32.gmra.mxu0 %v296
    %v336 = vpop.f32.mrf.mxu0
    %v337 = vadd.f32 %v272, %v336
    %338 = vdwg.mxu0
    %v339 = vld [vmem:[%s5] sm:$0xff]
    %v340 = vld [vmem:[%s5 + $0x8] sm:$0xff]
    %v341 = vld [vmem:[%s5 + $0x10] sm:$0xff]
    %v342 = vld [vmem:[%s5 + $0x18] sm:$0xff]
    %v343 = vld [vmem:[%s5 + $0x20] sm:$0xff]
    %v344 = vld [vmem:[%s5 + $0x28] sm:$0xff]
    %v345 = vld [vmem:[%s5 + $0x30] sm:$0xff]
    %v346 = vld [vmem:[%s5 + $0x38] sm:$0xff]
    %v347 = vlaneseq
    %v348 = vand.u32 %v347, 127
    %349 = vset.pattern.permute.xlu0 0
    %350 = vperm.xlu0 %349, %v339
    %v351 = vpop.permute.xlu0 %350
    %352 = vset.pattern.permute.xlu0 0
    %353 = vperm.xlu0 %352, %v340
    %v354 = vpop.permute.xlu0 %353
    %355 = vset.pattern.permute.xlu0 0
    %356 = vperm.xlu0 %355, %v341
    %v357 = vpop.permute.xlu0 %356
    %358 = vset.pattern.permute.xlu0 0
    %359 = vperm.xlu0 %358, %v342
    %v360 = vpop.permute.xlu0 %359
    %361 = vset.pattern.permute.xlu0 0
    %362 = vperm.xlu0 %361, %v343
    %v363 = vpop.permute.xlu0 %362
    %364 = vset.pattern.permute.xlu0 0
    %365 = vperm.xlu0 %364, %v344
    %v366 = vpop.permute.xlu0 %365
    %367 = vset.pattern.permute.xlu0 0
    %368 = vperm.xlu0 %367, %v345
    %v369 = vpop.permute.xlu0 %368
    %370 = vset.pattern.permute.xlu0 0
    %371 = vperm.xlu0 %370, %v346
    %v372 = vpop.permute.xlu0 %371
    %vm373 = vcmp.eq.s32.totalorder %v348, %v351
    %vm374 = vcmp.eq.s32.totalorder %v348, %v354
    %vm375 = vcmp.eq.s32.totalorder %v348, %v357
    %vm376 = vcmp.eq.s32.totalorder %v348, %v360
    %vm377 = vcmp.eq.s32.totalorder %v348, %v363
    %vm378 = vcmp.eq.s32.totalorder %v348, %v366
    %vm379 = vcmp.eq.s32.totalorder %v348, %v369
    %vm380 = vcmp.eq.s32.totalorder %v348, %v372
    %v381 = vsel %vm373, 1, 0
    %v382 = vsel %vm374, 1, 0
    %v383 = vsel %vm375, 1, 0
    %v384 = vsel %vm376, 1, 0
    %v385 = vsel %vm377, 1, 0
    %v386 = vsel %vm378, 1, 0
    %v387 = vsel %vm379, 1, 0
    %v388 = vsel %vm380, 1, 0
    %v389 = vcvt.s32.f32 %v381
    %v390 = vcvt.s32.f32 %v382
    %v391 = vcvt.s32.f32 %v383
    %v392 = vcvt.s32.f32 %v384
    %v393 = vcvt.s32.f32 %v385
    %v394 = vcvt.s32.f32 %v386
    %v395 = vcvt.s32.f32 %v387
    %v396 = vcvt.s32.f32 %v388
    %vm397 = vcmask 523264
    %v399 = vsel %vm397, %v389, 0
    %v402 = vsel %vm397, %v390, 0
    %v405 = vsel %vm397, %v391, 0
    %v408 = vsel %vm397, %v392, 0
    %v411 = vsel %vm397, %v393, 0
    %v414 = vsel %vm397, %v394, 0
    %v417 = vsel %vm397, %v395, 0
    %v420 = vsel %vm397, %v396, 0
    %422 = vmatpush.msra.mxu0 0.0
    %423 = vmatpush.msra.mxu0 0.0
    %424 = vmatpush.msra.mxu0 0.0
    %425 = vmatpush.msra.mxu0 0.0
    %426 = vmatpush.msra.mxu0 0.0
    %427 = vmatpush.msra.mxu0 0.0
    %428 = vmatpush.msra.mxu0 0.0
    %429 = vmatpush.msra.mxu0 0.0
    %430 = vmatpush.msra.mxu0 %v337
    %431 = vmatpush.msra.mxu0 %v334
    %432 = vmatpush.msra.mxu0 %v331
    %433 = vmatpush.msra.mxu0 %v328
    %434 = vmatpush.msra.mxu0 %v325
    %435 = vmatpush.msra.mxu0 %v322
    %436 = vmatpush.msra.mxu0 %v319
    %437 = vmatpush.msra.mxu0 %v316
    %438 = vmatmul.f32.gmra.mxu0 %v399
    %v439 = vpop.f32.mrf.mxu0
    %v440 = vadd.f32 0.0, %v439
    %441 = vmatmul.f32.gmra.mxu0 %v402
    %v442 = vpop.f32.mrf.mxu0
    %v443 = vadd.f32 0.0, %v442
    %444 = vmatmul.f32.gmra.mxu0 %v405
    %v445 = vpop.f32.mrf.mxu0
    %v446 = vadd.f32 0.0, %v445
    %447 = vmatmul.f32.gmra.mxu0 %v408
    %v448 = vpop.f32.mrf.mxu0
    %v449 = vadd.f32 0.0, %v448
    %450 = vmatmul.f32.gmra.mxu0 %v411
    %v451 = vpop.f32.mrf.mxu0
    %v452 = vadd.f32 0.0, %v451
    %453 = vmatmul.f32.gmra.mxu0 %v414
    %v454 = vpop.f32.mrf.mxu0
    %v455 = vadd.f32 0.0, %v454
    %456 = vmatmul.f32.gmra.mxu0 %v417
    %v457 = vpop.f32.mrf.mxu0
    %v458 = vadd.f32 0.0, %v457
    %459 = vmatmul.f32.gmra.mxu0 %v420
    %v460 = vpop.f32.mrf.mxu0
    %v461 = vadd.f32 0.0, %v460
    %462 = vdwg.mxu0
    %463 = vset.pattern.permute.xlu0 1
    %464 = vperm.xlu0 %463, %v339
    %v465 = vpop.permute.xlu0 %464
    %466 = vset.pattern.permute.xlu0 1
    %467 = vperm.xlu0 %466, %v340
    %v468 = vpop.permute.xlu0 %467
    %469 = vset.pattern.permute.xlu0 1
    %470 = vperm.xlu0 %469, %v341
    %v471 = vpop.permute.xlu0 %470
    %472 = vset.pattern.permute.xlu0 1
    %473 = vperm.xlu0 %472, %v342
    %v474 = vpop.permute.xlu0 %473
    %475 = vset.pattern.permute.xlu0 1
    %476 = vperm.xlu0 %475, %v343
    %v477 = vpop.permute.xlu0 %476
    %478 = vset.pattern.permute.xlu0 1
    %479 = vperm.xlu0 %478, %v344
    %v480 = vpop.permute.xlu0 %479
    %481 = vset.pattern.permute.xlu0 1
    %482 = vperm.xlu0 %481, %v345
    %v483 = vpop.permute.xlu0 %482
    %484 = vset.pattern.permute.xlu0 1
    %485 = vperm.xlu0 %484, %v346
    %v486 = vpop.permute.xlu0 %485
    %vm487 = vcmp.eq.s32.totalorder %v348, %v465
    %vm488 = vcmp.eq.s32.totalorder %v348, %v468
    %vm489 = vcmp.eq.s32.totalorder %v348, %v471
    %vm490 = vcmp.eq.s32.totalorder %v348, %v474
    %vm491 = vcmp.eq.s32.totalorder %v348, %v477
    %vm492 = vcmp.eq.s32.totalorder %v348, %v480
    %vm493 = vcmp.eq.s32.totalorder %v348, %v483
    %vm494 = vcmp.eq.s32.totalorder %v348, %v486
    %v495 = vsel %vm487, 1, 0
    %v496 = vsel %vm488, 1, 0
    %v497 = vsel %vm489, 1, 0
    %v498 = vsel %vm490, 1, 0
    %v499 = vsel %vm491, 1, 0
    %v500 = vsel %vm492, 1, 0
    %v501 = vsel %vm493, 1, 0
    %v502 = vsel %vm494, 1, 0
    %v503 = vcvt.s32.f32 %v495
    %v504 = vcvt.s32.f32 %v496
    %v505 = vcvt.s32.f32 %v497
    %v506 = vcvt.s32.f32 %v498
    %v507 = vcvt.s32.f32 %v499
    %v508 = vcvt.s32.f32 %v500
    %v509 = vcvt.s32.f32 %v501
    %v510 = vcvt.s32.f32 %v502
    %v512 = vsel %vm397, %v503, 0
    %v515 = vsel %vm397, %v504, 0
    %v518 = vsel %vm397, %v505, 0
    %v521 = vsel %vm397, %v506, 0
    %v524 = vsel %vm397, %v507, 0
    %v527 = vsel %vm397, %v508, 0
    %v530 = vsel %vm397, %v509, 0
    %v533 = vsel %vm397, %v510, 0
    %535 = vmatpush.msra.mxu0 0.0
    %536 = vmatpush.msra.mxu0 0.0
    %537 = vmatpush.msra.mxu0 0.0
    %538 = vmatpush.msra.mxu0 0.0
    %539 = vmatpush.msra.mxu0 0.0
    %540 = vmatpush.msra.mxu0 0.0
    %541 = vmatpush.msra.mxu0 0.0
    %542 = vmatpush.msra.mxu0 0.0
    %543 = vmatpush.msra.mxu0 %v337
    %544 = vmatpush.msra.mxu0 %v334
    %545 = vmatpush.msra.mxu0 %v331
    %546 = vmatpush.msra.mxu0 %v328
    %547 = vmatpush.msra.mxu0 %v325
    %548 = vmatpush.msra.mxu0 %v322
    %549 = vmatpush.msra.mxu0 %v319
    %550 = vmatpush.msra.mxu0 %v316
    %551 = vmatmul.f32.gmra.mxu0 %v512
    %v552 = vpop.f32.mrf.mxu0
    %v553 = vadd.f32 0.0, %v552
    %554 = vmatmul.f32.gmra.mxu0 %v515
    %v555 = vpop.f32.mrf.mxu0
    %v556 = vadd.f32 0.0, %v555
    %557 = vmatmul.f32.gmra.mxu0 %v518
    %v558 = vpop.f32.mrf.mxu0
    %v559 = vadd.f32 0.0, %v558
    %560 = vmatmul.f32.gmra.mxu0 %v521
    %v561 = vpop.f32.mrf.mxu0
    %v562 = vadd.f32 0.0, %v561
    %563 = vmatmul.f32.gmra.mxu0 %v524
    %v564 = vpop.f32.mrf.mxu0
    %v565 = vadd.f32 0.0, %v564
    %566 = vmatmul.f32.gmra.mxu0 %v527
    %v567 = vpop.f32.mrf.mxu0
    %v568 = vadd.f32 0.0, %v567
    %569 = vmatmul.f32.gmra.mxu0 %v530
    %v570 = vpop.f32.mrf.mxu0
    %v571 = vadd.f32 0.0, %v570
    %572 = vmatmul.f32.gmra.mxu0 %v533
    %v573 = vpop.f32.mrf.mxu0
    %v574 = vadd.f32 0.0, %v573
    %575 = vdwg.mxu0
    %576 = vset.pattern.permute.xlu0 2
    %577 = vperm.xlu0 %576, %v339
    %v578 = vpop.permute.xlu0 %577
    %579 = vset.pattern.permute.xlu0 2
    %580 = vperm.xlu0 %579, %v340
    %v581 = vpop.permute.xlu0 %580
    %582 = vset.pattern.permute.xlu0 2
    %583 = vperm.xlu0 %582, %v341
    %v584 = vpop.permute.xlu0 %583
    %585 = vset.pattern.permute.xlu0 2
    %586 = vperm.xlu0 %585, %v342
    %v587 = vpop.permute.xlu0 %586
    %588 = vset.pattern.permute.xlu0 2
    %589 = vperm.xlu0 %588, %v343
    %v590 = vpop.permute.xlu0 %589
    %591 = vset.pattern.permute.xlu0 2
    %592 = vperm.xlu0 %591, %v344
    %v593 = vpop.permute.xlu0 %592
    %594 = vset.pattern.permute.xlu0 2
    %595 = vperm.xlu0 %594, %v345
    %v596 = vpop.permute.xlu0 %595
    %597 = vset.pattern.permute.xlu0 2
    %598 = vperm.xlu0 %597, %v346
    %v599 = vpop.permute.xlu0 %598
    %vm600 = vcmp.eq.s32.totalorder %v348, %v578
    %vm601 = vcmp.eq.s32.totalorder %v348, %v581
    %vm602 = vcmp.eq.s32.totalorder %v348, %v584
    %vm603 = vcmp.eq.s32.totalorder %v348, %v587
    %vm604 = vcmp.eq.s32.totalorder %v348, %v590
    %vm605 = vcmp.eq.s32.totalorder %v348, %v593
    %vm606 = vcmp.eq.s32.totalorder %v348, %v596
    %vm607 = vcmp.eq.s32.totalorder %v348, %v599
    %v608 = vsel %vm600, 1, 0
    %v609 = vsel %vm601, 1, 0
    %v610 = vsel %vm602, 1, 0
    %v611 = vsel %vm603, 1, 0
    %v612 = vsel %vm604, 1, 0
    %v613 = vsel %vm605, 1, 0
    %v614 = vsel %vm606, 1, 0
    %v615 = vsel %vm607, 1, 0
    %v616 = vcvt.s32.f32 %v608
    %v617 = vcvt.s32.f32 %v609
    %v618 = vcvt.s32.f32 %v610
    %v619 = vcvt.s32.f32 %v611
    %v620 = vcvt.s32.f32 %v612
    %v621 = vcvt.s32.f32 %v613
    %v622 = vcvt.s32.f32 %v614
    %v623 = vcvt.s32.f32 %v615
    %v625 = vsel %vm397, %v616, 0
    %v628 = vsel %vm397, %v617, 0
    %v631 = vsel %vm397, %v618, 0
    %v634 = vsel %vm397, %v619, 0
    %v637 = vsel %vm397, %v620, 0
    %v640 = vsel %vm397, %v621, 0
    %v643 = vsel %vm397, %v622, 0
    %v646 = vsel %vm397, %v623, 0
    %648 = vmatpush.msra.mxu0 0.0
    %649 = vmatpush.msra.mxu0 0.0
    %650 = vmatpush.msra.mxu0 0.0
    %651 = vmatpush.msra.mxu0 0.0
    %652 = vmatpush.msra.mxu0 0.0
    %653 = vmatpush.msra.mxu0 0.0
    %654 = vmatpush.msra.mxu0 0.0
    %655 = vmatpush.msra.mxu0 0.0
    %656 = vmatpush.msra.mxu0 %v337
    %657 = vmatpush.msra.mxu0 %v334
    %658 = vmatpush.msra.mxu0 %v331
    %659 = vmatpush.msra.mxu0 %v328
    %660 = vmatpush.msra.mxu0 %v325
    %661 = vmatpush.msra.mxu0 %v322
    %662 = vmatpush.msra.mxu0 %v319
    %663 = vmatpush.msra.mxu0 %v316
    %664 = vmatmul.f32.gmra.mxu0 %v625
    %v665 = vpop.f32.mrf.mxu0
    %v666 = vadd.f32 0.0, %v665
    %667 = vmatmul.f32.gmra.mxu0 %v628
    %v668 = vpop.f32.mrf.mxu0
    %v669 = vadd.f32 0.0, %v668
    %670 = vmatmul.f32.gmra.mxu0 %v631
    %v671 = vpop.f32.mrf.mxu0
    %v672 = vadd.f32 0.0, %v671
    %673 = vmatmul.f32.gmra.mxu0 %v634
    %v674 = vpop.f32.mrf.mxu0
    %v675 = vadd.f32 0.0, %v674
    %676 = vmatmul.f32.gmra.mxu0 %v637
    %v677 = vpop.f32.mrf.mxu0
    %v678 = vadd.f32 0.0, %v677
    %679 = vmatmul.f32.gmra.mxu0 %v640
    %v680 = vpop.f32.mrf.mxu0
    %v681 = vadd.f32 0.0, %v680
    %682 = vmatmul.f32.gmra.mxu0 %v643
    %v683 = vpop.f32.mrf.mxu0
    %v684 = vadd.f32 0.0, %v683
    %685 = vmatmul.f32.gmra.mxu0 %v646
    %v686 = vpop.f32.mrf.mxu0
    %v687 = vadd.f32 0.0, %v686
    %688 = vdwg.mxu0
    %689 = vset.pattern.permute.xlu0 3
    %690 = vperm.xlu0 %689, %v339
    %v691 = vpop.permute.xlu0 %690
    %692 = vset.pattern.permute.xlu0 3
    %693 = vperm.xlu0 %692, %v340
    %v694 = vpop.permute.xlu0 %693
    %695 = vset.pattern.permute.xlu0 3
    %696 = vperm.xlu0 %695, %v341
    %v697 = vpop.permute.xlu0 %696
    %698 = vset.pattern.permute.xlu0 3
    %699 = vperm.xlu0 %698, %v342
    %v700 = vpop.permute.xlu0 %699
    %701 = vset.pattern.permute.xlu0 3
    %702 = vperm.xlu0 %701, %v343
    %v703 = vpop.permute.xlu0 %702
    %704 = vset.pattern.permute.xlu0 3
    %705 = vperm.xlu0 %704, %v344
    %v706 = vpop.permute.xlu0 %705
    %707 = vset.pattern.permute.xlu0 3
    %708 = vperm.xlu0 %707, %v345
    %v709 = vpop.permute.xlu0 %708
    %710 = vset.pattern.permute.xlu0 3
    %711 = vperm.xlu0 %710, %v346
    %v712 = vpop.permute.xlu0 %711
    %vm713 = vcmp.eq.s32.totalorder %v348, %v691
    %vm714 = vcmp.eq.s32.totalorder %v348, %v694
    %vm715 = vcmp.eq.s32.totalorder %v348, %v697
    %vm716 = vcmp.eq.s32.totalorder %v348, %v700
    %vm717 = vcmp.eq.s32.totalorder %v348, %v703
    %vm718 = vcmp.eq.s32.totalorder %v348, %v706
    %vm719 = vcmp.eq.s32.totalorder %v348, %v709
    %vm720 = vcmp.eq.s32.totalorder %v348, %v712
    %v721 = vsel %vm713, 1, 0
    %v722 = vsel %vm714, 1, 0
    %v723 = vsel %vm715, 1, 0
    %v724 = vsel %vm716, 1, 0
    %v725 = vsel %vm717, 1, 0
    %v726 = vsel %vm718, 1, 0
    %v727 = vsel %vm719, 1, 0
    %v728 = vsel %vm720, 1, 0
    %v729 = vcvt.s32.f32 %v721
    %v730 = vcvt.s32.f32 %v722
    %v731 = vcvt.s32.f32 %v723
    %v732 = vcvt.s32.f32 %v724
    %v733 = vcvt.s32.f32 %v725
    %v734 = vcvt.s32.f32 %v726
    %v735 = vcvt.s32.f32 %v727
    %v736 = vcvt.s32.f32 %v728
    %v738 = vsel %vm397, %v729, 0
    %v741 = vsel %vm397, %v730, 0
    %v744 = vsel %vm397, %v731, 0
    %v747 = vsel %vm397, %v732, 0
    %v750 = vsel %vm397, %v733, 0
    %v753 = vsel %vm397, %v734, 0
    %v756 = vsel %vm397, %v735, 0
    %v759 = vsel %vm397, %v736, 0
    %761 = vmatpush.msra.mxu0 0.0
    %762 = vmatpush.msra.mxu0 0.0
    %763 = vmatpush.msra.mxu0 0.0
    %764 = vmatpush.msra.mxu0 0.0
    %765 = vmatpush.msra.mxu0 0.0
    %766 = vmatpush.msra.mxu0 0.0
    %767 = vmatpush.msra.mxu0 0.0
    %768 = vmatpush.msra.mxu0 0.0
    %769 = vmatpush.msra.mxu0 %v337
    %770 = vmatpush.msra.mxu0 %v334
    %771 = vmatpush.msra.mxu0 %v331
    %772 = vmatpush.msra.mxu0 %v328
    %773 = vmatpush.msra.mxu0 %v325
    %774 = vmatpush.msra.mxu0 %v322
    %775 = vmatpush.msra.mxu0 %v319
    %776 = vmatpush.msra.mxu0 %v316
    %777 = vmatmul.f32.gmra.mxu0 %v738
    %v778 = vpop.f32.mrf.mxu0
    %v779 = vadd.f32 0.0, %v778
    %780 = vmatmul.f32.gmra.mxu0 %v741
    %v781 = vpop.f32.mrf.mxu0
    %v782 = vadd.f32 0.0, %v781
    %783 = vmatmul.f32.gmra.mxu0 %v744
    %v784 = vpop.f32.mrf.mxu0
    %v785 = vadd.f32 0.0, %v784
    %786 = vmatmul.f32.gmra.mxu0 %v747
    %v787 = vpop.f32.mrf.mxu0
    %v788 = vadd.f32 0.0, %v787
    %789 = vmatmul.f32.gmra.mxu0 %v750
    %v790 = vpop.f32.mrf.mxu0
    %v791 = vadd.f32 0.0, %v790
    %792 = vmatmul.f32.gmra.mxu0 %v753
    %v793 = vpop.f32.mrf.mxu0
    %v794 = vadd.f32 0.0, %v793
    %795 = vmatmul.f32.gmra.mxu0 %v756
    %v796 = vpop.f32.mrf.mxu0
    %v797 = vadd.f32 0.0, %v796
    %798 = vmatmul.f32.gmra.mxu0 %v759
    %v799 = vpop.f32.mrf.mxu0
    %v800 = vadd.f32 0.0, %v799
    %801 = vdwg.mxu0
    %v802 = vmul.f32 %v440, %v553
    %v803 = vmul.f32 %v443, %v556
    %v804 = vmul.f32 %v446, %v559
    %v805 = vmul.f32 %v449, %v562
    %v806 = vmul.f32 %v452, %v565
    %v807 = vmul.f32 %v455, %v568
    %v808 = vmul.f32 %v458, %v571
    %v809 = vmul.f32 %v461, %v574
    %v810 = vsel %vm40, %v802, 0.0
    %811 = vadd.xlane.f32.xlu0 %v810
    %v812 = vpop.xlane.xlu0 %811
    %v813 = vsel %vm40, %v803, 0.0
    %814 = vadd.xlane.f32.xlu0 %v813
    %v815 = vpop.xlane.xlu0 %814
    %v816 = vsel %vm40, %v804, 0.0
    %817 = vadd.xlane.f32.xlu0 %v816
    %v818 = vpop.xlane.xlu0 %817
    %v819 = vsel %vm40, %v805, 0.0
    %820 = vadd.xlane.f32.xlu0 %v819
    %v821 = vpop.xlane.xlu0 %820
    %v822 = vsel %vm40, %v806, 0.0
    %823 = vadd.xlane.f32.xlu0 %v822
    %v824 = vpop.xlane.xlu0 %823
    %v825 = vsel %vm40, %v807, 0.0
    %826 = vadd.xlane.f32.xlu0 %v825
    %v827 = vpop.xlane.xlu0 %826
    %v828 = vsel %vm40, %v808, 0.0
    %829 = vadd.xlane.f32.xlu0 %v828
    %v830 = vpop.xlane.xlu0 %829
    %v831 = vsel %vm40, %v809, 0.0
    %832 = vadd.xlane.f32.xlu0 %v831
    %v833 = vpop.xlane.xlu0 %832
    %v834 = vmul.f32 %v666, %v779
    %v835 = vmul.f32 %v669, %v782
    %v836 = vmul.f32 %v672, %v785
    %v837 = vmul.f32 %v675, %v788
    %v838 = vmul.f32 %v678, %v791
    %v839 = vmul.f32 %v681, %v794
    %v840 = vmul.f32 %v684, %v797
    %v841 = vmul.f32 %v687, %v800
    %v842 = vsel %vm40, %v834, 0.0
    %843 = vadd.xlane.f32.xlu0 %v842
    %v844 = vpop.xlane.xlu0 %843
    %v845 = vsel %vm40, %v835, 0.0
    %846 = vadd.xlane.f32.xlu0 %v845
    %v847 = vpop.xlane.xlu0 %846
    %v848 = vsel %vm40, %v836, 0.0
    %849 = vadd.xlane.f32.xlu0 %v848
    %v850 = vpop.xlane.xlu0 %849
    %v851 = vsel %vm40, %v837, 0.0
    %852 = vadd.xlane.f32.xlu0 %v851
    %v853 = vpop.xlane.xlu0 %852
    %v854 = vsel %vm40, %v838, 0.0
    %855 = vadd.xlane.f32.xlu0 %v854
    %v856 = vpop.xlane.xlu0 %855
    %v857 = vsel %vm40, %v839, 0.0
    %858 = vadd.xlane.f32.xlu0 %v857
    %v859 = vpop.xlane.xlu0 %858
    %v860 = vsel %vm40, %v840, 0.0
    %861 = vadd.xlane.f32.xlu0 %v860
    %v862 = vpop.xlane.xlu0 %861
    %v863 = vsel %vm40, %v841, 0.0
    %864 = vadd.xlane.f32.xlu0 %v863
    %v865 = vpop.xlane.xlu0 %864
    %v866 = vmax.f32 %v812, 0.0
    %v867 = vmax.f32 %v815, 0.0
    %v868 = vmax.f32 %v818, 0.0
    %v869 = vmax.f32 %v821, 0.0
    %v870 = vmax.f32 %v824, 0.0
    %v871 = vmax.f32 %v827, 0.0
    %v872 = vmax.f32 %v830, 0.0
    %v873 = vmax.f32 %v833, 0.0
    %v874 = vsub.f32 %v866, %v812
    %v875 = vsub.f32 %v867, %v815
    %v876 = vsub.f32 %v868, %v818
    %v877 = vsub.f32 %v869, %v821
    %v878 = vsub.f32 %v870, %v824
    %v879 = vsub.f32 %v871, %v827
    %v880 = vsub.f32 %v872, %v830
    %v881 = vsub.f32 %v873, %v833
    %v882 = vand.u32 2147483647, %v812
    %v883 = vand.u32 2147483647, %v815
    %v884 = vand.u32 2147483647, %v818
    %v885 = vand.u32 2147483647, %v821
    %v886 = vand.u32 2147483647, %v824
    %v887 = vand.u32 2147483647, %v827
    %v888 = vand.u32 2147483647, %v830
    %v889 = vand.u32 2147483647, %v833
    %v890 = vsub.f32 0.0, %v882
    %v891 = vsub.f32 0.0, %v883
    %v892 = vsub.f32 0.0, %v884
    %v893 = vsub.f32 0.0, %v885
    %v894 = vsub.f32 0.0, %v886
    %v895 = vsub.f32 0.0, %v887
    %v896 = vsub.f32 0.0, %v888
    %v897 = vsub.f32 0.0, %v889
    %v898 = vmul.f32 %v890, 1.442695
    %v899 = vpow.pop %v898
    %v900 = vmul.f32 %v891, 1.442695
    %v901 = vpow.pop %v900
    %v902 = vmul.f32 %v892, 1.442695
    %v903 = vpow.pop %v902
    %v904 = vmul.f32 %v893, 1.442695
    %v905 = vpow.pop %v904
    %v906 = vmul.f32 %v894, 1.442695
    %v907 = vpow.pop %v906
    %v908 = vmul.f32 %v895, 1.442695
    %v909 = vpow.pop %v908
    %v910 = vmul.f32 %v896, 1.442695
    %v911 = vpow.pop %v910
    %v912 = vmul.f32 %v897, 1.442695
    %v913 = vpow.pop %v912
    %v914 = vadd.f32 %v899, 1.0
    %v915 = vlog2.pop %v914
    %v916 = vmul.f32 %v915, 0.6931472
    %v917 = vmul.f32 -0.5, %v899
    %v918 = vadd.f32 %v917, 1.0
    %v919 = vmul.f32 %v918, %v899
    %v920 = vand.u32 2147483647, %v899
    %vm921 = vcmp.lt.f32.partialorder %v920, 0.0004427343
    %v922 = vsel %vm921, %v919, %v916
    %v923 = vadd.f32 %v901, 1.0
    %v924 = vlog2.pop %v923
    %v925 = vmul.f32 %v924, 0.6931472
    %v926 = vmul.f32 -0.5, %v901
    %v927 = vadd.f32 %v926, 1.0
    %v928 = vmul.f32 %v927, %v901
    %v929 = vand.u32 2147483647, %v901
    %vm930 = vcmp.lt.f32.partialorder %v929, 0.0004427343
    %v931 = vsel %vm930, %v928, %v925
    %v932 = vadd.f32 %v903, 1.0
    %v933 = vlog2.pop %v932
    %v934 = vmul.f32 %v933, 0.6931472
    %v935 = vmul.f32 -0.5, %v903
    %v936 = vadd.f32 %v935, 1.0
    %v937 = vmul.f32 %v936, %v903
    %v938 = vand.u32 2147483647, %v903
    %vm939 = vcmp.lt.f32.partialorder %v938, 0.0004427343
    %v940 = vsel %vm939, %v937, %v934
    %v941 = vadd.f32 %v905, 1.0
    %v942 = vlog2.pop %v941
    %v943 = vmul.f32 %v942, 0.6931472
    %v944 = vmul.f32 -0.5, %v905
    %v945 = vadd.f32 %v944, 1.0
    %v946 = vmul.f32 %v945, %v905
    %v947 = vand.u32 2147483647, %v905
    %vm948 = vcmp.lt.f32.partialorder %v947, 0.0004427343
    %v949 = vsel %vm948, %v946, %v943
    %v950 = vadd.f32 %v907, 1.0
    %v951 = vlog2.pop %v950
    %v952 = vmul.f32 %v951, 0.6931472
    %v953 = vmul.f32 -0.5, %v907
    %v954 = vadd.f32 %v953, 1.0
    %v955 = vmul.f32 %v954, %v907
    %v956 = vand.u32 2147483647, %v907
    %vm957 = vcmp.lt.f32.partialorder %v956, 0.0004427343
    %v958 = vsel %vm957, %v955, %v952
    %v959 = vadd.f32 %v909, 1.0
    %v960 = vlog2.pop %v959
    %v961 = vmul.f32 %v960, 0.6931472
    %v962 = vmul.f32 -0.5, %v909
    %v963 = vadd.f32 %v962, 1.0
    %v964 = vmul.f32 %v963, %v909
    %v965 = vand.u32 2147483647, %v909
    %vm966 = vcmp.lt.f32.partialorder %v965, 0.0004427343
    %v967 = vsel %vm966, %v964, %v961
    %v968 = vadd.f32 %v911, 1.0
    %v969 = vlog2.pop %v968
    %v970 = vmul.f32 %v969, 0.6931472
    %v971 = vmul.f32 -0.5, %v911
    %v972 = vadd.f32 %v971, 1.0
    %v973 = vmul.f32 %v972, %v911
    %v974 = vand.u32 2147483647, %v911
    %vm975 = vcmp.lt.f32.partialorder %v974, 0.0004427343
    %v976 = vsel %vm975, %v973, %v970
    %v977 = vadd.f32 %v913, 1.0
    %v978 = vlog2.pop %v977
    %v979 = vmul.f32 %v978, 0.6931472
    %v980 = vmul.f32 -0.5, %v913
    %v981 = vadd.f32 %v980, 1.0
    %v982 = vmul.f32 %v981, %v913
    %v983 = vand.u32 2147483647, %v913
    %vm984 = vcmp.lt.f32.partialorder %v983, 0.0004427343
    %v985 = vsel %vm984, %v982, %v979
    %v986 = vadd.f32 %v874, %v922
    %v987 = vadd.f32 %v875, %v931
    %v988 = vadd.f32 %v876, %v940
    %v989 = vadd.f32 %v877, %v949
    %v990 = vadd.f32 %v878, %v958
    %v991 = vadd.f32 %v879, %v967
    %v992 = vadd.f32 %v880, %v976
    %v993 = vadd.f32 %v881, %v985
    %v994 = vmax.f32 %v844, 0.0
    %v995 = vmax.f32 %v847, 0.0
    %v996 = vmax.f32 %v850, 0.0
    %v997 = vmax.f32 %v853, 0.0
    %v998 = vmax.f32 %v856, 0.0
    %v999 = vmax.f32 %v859, 0.0
    %v1000 = vmax.f32 %v862, 0.0
    %v1001 = vmax.f32 %v865, 0.0
    %v1002 = vmul.f32 %v844, 0.0
    %v1003 = vmul.f32 %v847, 0.0
    %v1004 = vmul.f32 %v850, 0.0
    %v1005 = vmul.f32 %v853, 0.0
    %v1006 = vmul.f32 %v856, 0.0
    %v1007 = vmul.f32 %v859, 0.0
    %v1008 = vmul.f32 %v862, 0.0
    %v1009 = vmul.f32 %v865, 0.0
    %v1010 = vsub.f32 %v994, %v1002
    %v1011 = vsub.f32 %v995, %v1003
    %v1012 = vsub.f32 %v996, %v1004
    %v1013 = vsub.f32 %v997, %v1005
    %v1014 = vsub.f32 %v998, %v1006
    %v1015 = vsub.f32 %v999, %v1007
    %v1016 = vsub.f32 %v1000, %v1008
    %v1017 = vsub.f32 %v1001, %v1009
    %v1018 = vand.u32 2147483647, %v844
    %v1019 = vand.u32 2147483647, %v847
    %v1020 = vand.u32 2147483647, %v850
    %v1021 = vand.u32 2147483647, %v853
    %v1022 = vand.u32 2147483647, %v856
    %v1023 = vand.u32 2147483647, %v859
    %v1024 = vand.u32 2147483647, %v862
    %v1025 = vand.u32 2147483647, %v865
    %v1026 = vsub.f32 0.0, %v1018
    %v1027 = vsub.f32 0.0, %v1019
    %v1028 = vsub.f32 0.0, %v1020
    %v1029 = vsub.f32 0.0, %v1021
    %v1030 = vsub.f32 0.0, %v1022
    %v1031 = vsub.f32 0.0, %v1023
    %v1032 = vsub.f32 0.0, %v1024
    %v1033 = vsub.f32 0.0, %v1025
    %v1034 = vmul.f32 %v1026, 1.442695
    %v1035 = vpow.pop %v1034
    %v1036 = vmul.f32 %v1027, 1.442695
    %v1037 = vpow.pop %v1036
    %v1038 = vmul.f32 %v1028, 1.442695
    %v1039 = vpow.pop %v1038
    %v1040 = vmul.f32 %v1029, 1.442695
    %v1041 = vpow.pop %v1040
    %v1042 = vmul.f32 %v1030, 1.442695
    %v1043 = vpow.pop %v1042
    %v1044 = vmul.f32 %v1031, 1.442695
    %v1045 = vpow.pop %v1044
    %v1046 = vmul.f32 %v1032, 1.442695
    %v1047 = vpow.pop %v1046
    %v1048 = vmul.f32 %v1033, 1.442695
    %v1049 = vpow.pop %v1048
    %v1050 = vadd.f32 %v1035, 1.0
    %v1051 = vlog2.pop %v1050
    %v1052 = vmul.f32 %v1051, 0.6931472
    %v1053 = vmul.f32 -0.5, %v1035
    %v1054 = vadd.f32 %v1053, 1.0
    %v1055 = vmul.f32 %v1054, %v1035
    %v1056 = vand.u32 2147483647, %v1035
    %vm1057 = vcmp.lt.f32.partialorder %v1056, 0.0004427343
    %v1058 = vsel %vm1057, %v1055, %v1052
    %v1059 = vadd.f32 %v1037, 1.0
    %v1060 = vlog2.pop %v1059
    %v1061 = vmul.f32 %v1060, 0.6931472
    %v1062 = vmul.f32 -0.5, %v1037
    %v1063 = vadd.f32 %v1062, 1.0
    %v1064 = vmul.f32 %v1063, %v1037
    %v1065 = vand.u32 2147483647, %v1037
    %vm1066 = vcmp.lt.f32.partialorder %v1065, 0.0004427343
    %v1067 = vsel %vm1066, %v1064, %v1061
    %v1068 = vadd.f32 %v1039, 1.0
    %v1069 = vlog2.pop %v1068
    %v1070 = vmul.f32 %v1069, 0.6931472
    %v1071 = vmul.f32 -0.5, %v1039
    %v1072 = vadd.f32 %v1071, 1.0
    %v1073 = vmul.f32 %v1072, %v1039
    %v1074 = vand.u32 2147483647, %v1039
    %vm1075 = vcmp.lt.f32.partialorder %v1074, 0.0004427343
    %v1076 = vsel %vm1075, %v1073, %v1070
    %v1077 = vadd.f32 %v1041, 1.0
    %v1078 = vlog2.pop %v1077
    %v1079 = vmul.f32 %v1078, 0.6931472
    %v1080 = vmul.f32 -0.5, %v1041
    %v1081 = vadd.f32 %v1080, 1.0
    %v1082 = vmul.f32 %v1081, %v1041
    %v1083 = vand.u32 2147483647, %v1041
    %vm1084 = vcmp.lt.f32.partialorder %v1083, 0.0004427343
    %v1085 = vsel %vm1084, %v1082, %v1079
    %v1086 = vadd.f32 %v1043, 1.0
    %v1087 = vlog2.pop %v1086
    %v1088 = vmul.f32 %v1087, 0.6931472
    %v1089 = vmul.f32 -0.5, %v1043
    %v1090 = vadd.f32 %v1089, 1.0
    %v1091 = vmul.f32 %v1090, %v1043
    %v1092 = vand.u32 2147483647, %v1043
    %vm1093 = vcmp.lt.f32.partialorder %v1092, 0.0004427343
    %v1094 = vsel %vm1093, %v1091, %v1088
    %v1095 = vadd.f32 %v1045, 1.0
    %v1096 = vlog2.pop %v1095
    %v1097 = vmul.f32 %v1096, 0.6931472
    %v1098 = vmul.f32 -0.5, %v1045
    %v1099 = vadd.f32 %v1098, 1.0
    %v1100 = vmul.f32 %v1099, %v1045
    %v1101 = vand.u32 2147483647, %v1045
    %vm1102 = vcmp.lt.f32.partialorder %v1101, 0.0004427343
    %v1103 = vsel %vm1102, %v1100, %v1097
    %v1104 = vadd.f32 %v1047, 1.0
    %v1105 = vlog2.pop %v1104
    %v1106 = vmul.f32 %v1105, 0.6931472
    %v1107 = vmul.f32 -0.5, %v1047
    %v1108 = vadd.f32 %v1107, 1.0
    %v1109 = vmul.f32 %v1108, %v1047
    %v1110 = vand.u32 2147483647, %v1047
    %vm1111 = vcmp.lt.f32.partialorder %v1110, 0.0004427343
    %v1112 = vsel %vm1111, %v1109, %v1106
    %v1113 = vadd.f32 %v1049, 1.0
    %v1114 = vlog2.pop %v1113
    %v1115 = vmul.f32 %v1114, 0.6931472
    %v1116 = vmul.f32 -0.5, %v1049
    %v1117 = vadd.f32 %v1116, 1.0
    %v1118 = vmul.f32 %v1117, %v1049
    %v1119 = vand.u32 2147483647, %v1049
    %vm1120 = vcmp.lt.f32.partialorder %v1119, 0.0004427343
    %v1121 = vsel %vm1120, %v1118, %v1115
    %v1122 = vadd.f32 %v1010, %v1058
    %v1123 = vadd.f32 %v1011, %v1067
    %v1124 = vadd.f32 %v1012, %v1076
    %v1125 = vadd.f32 %v1013, %v1085
    %v1126 = vadd.f32 %v1014, %v1094
    %v1127 = vadd.f32 %v1015, %v1103
    %v1128 = vadd.f32 %v1016, %v1112
    %v1129 = vadd.f32 %v1017, %v1121
    %v1130 = vlaneseq
    %v1131 = vshrl.u32 %v1130, 7
    %v1132 = vadd.s32 %v1131, 8
    %v1133 = vadd.s32 %v1131, 16
    %v1134 = vadd.s32 %v1131, 24
    %v1135 = vadd.s32 %v1131, 32
    %v1136 = vadd.s32 %v1131, 40
    %v1137 = vadd.s32 %v1131, 48
    %v1138 = vadd.s32 %v1131, 56
    %vm1139 = vcmp.lt.s32.totalorder %v1131, 63
    %vm1140 = vcmp.lt.s32.totalorder %v1132, 63
    %vm1141 = vcmp.lt.s32.totalorder %v1133, 63
    %vm1142 = vcmp.lt.s32.totalorder %v1134, 63
    %vm1143 = vcmp.lt.s32.totalorder %v1135, 63
    %vm1144 = vcmp.lt.s32.totalorder %v1136, 63
    %vm1145 = vcmp.lt.s32.totalorder %v1137, 63
    %vm1146 = vcmp.lt.s32.totalorder %v1138, 63
    %v1147 = vsel %vm1139, 1, 0
    %v1148 = vsel %vm1140, 1, 0
    %v1149 = vsel %vm1141, 1, 0
    %v1150 = vsel %vm1142, 1, 0
    %v1151 = vsel %vm1143, 1, 0
    %v1152 = vsel %vm1144, 1, 0
    %v1153 = vsel %vm1145, 1, 0
    %v1154 = vsel %vm1146, 1, 0
    %v1155 = vcvt.s32.f32 %v1147
    %v1156 = vcvt.s32.f32 %v1148
    %v1157 = vcvt.s32.f32 %v1149
    %v1158 = vcvt.s32.f32 %v1150
    %v1159 = vcvt.s32.f32 %v1151
    %v1160 = vcvt.s32.f32 %v1152
    %v1161 = vcvt.s32.f32 %v1153
    %v1162 = vcvt.s32.f32 %v1154
    %v1163 = vadd.f32 %v986, %v1122
    %v1164 = vadd.f32 %v987, %v1123
    %v1165 = vadd.f32 %v988, %v1124
    %v1166 = vadd.f32 %v989, %v1125
    %v1167 = vadd.f32 %v990, %v1126
    %v1168 = vadd.f32 %v991, %v1127
    %v1169 = vadd.f32 %v992, %v1128
    %v1170 = vadd.f32 %v993, %v1129
    %v1171 = vmul.f32 %v1163, %v1155
    %v1172 = vmul.f32 %v1164, %v1156
    %v1173 = vmul.f32 %v1165, %v1157
    %v1174 = vmul.f32 %v1166, %v1158
    %v1175 = vmul.f32 %v1167, %v1159
    %v1176 = vmul.f32 %v1168, %v1160
    %v1177 = vmul.f32 %v1169, %v1161
    %v1178 = vmul.f32 %v1170, %v1162
    %vm1179 = vcmask 7168
    %v1180 = vsel %vm1179, %v1171, 0.0
    %v1181 = vsel %vm1179, %v1172, 0.0
    %v1182 = vadd.f32 %v1180, %v1181
    %v1183 = vsel %vm1179, %v1173, 0.0
    %v1184 = vadd.f32 %v1182, %v1183
    %v1185 = vsel %vm1179, %v1174, 0.0
    %v1186 = vadd.f32 %v1184, %v1185
    %v1187 = vsel %vm1179, %v1175, 0.0
    %v1188 = vadd.f32 %v1186, %v1187
    %v1189 = vsel %vm1179, %v1176, 0.0
    %v1190 = vadd.f32 %v1188, %v1189
    %v1191 = vsel %vm1179, %v1177, 0.0
    %v1192 = vadd.f32 %v1190, %v1191
    %v1193 = vsel %vm1179, %v1178, 0.0
    %v1194 = vadd.f32 %v1192, %v1193
    %1195 = vadd.xlane.f32.xlu0 %v1194
    %v1196 = vpop.xlane.xlu0 %1195
    %v1197 = vrot.slane %v1196, 4
    %v1198 = vadd.f32 %v1196, %v1197
    %v1199 = vrot.slane %v1198, 2
    %v1200 = vadd.f32 %v1198, %v1199
    %v1201 = vrot.slane %v1200, 1
    %v1202 = vadd.f32 %v1200, %v1201
    %s1203 = vtos %v1202
    %s1204 = smul.f32 %s1203, 0.015873017
    %s1205 = scalar_lea.smem [#allocation2], 0
    %1206 = sst [smem:[%s1205]] %s1204
    // Predicated region
    $region26: #{tpu_custom_call.1} parent=1 // pred_check
      _
    $region27: #{tpu_custom_call.1} parent=1 // pred_check_branch
      %1208 = sbr.rel (0) target = $region29
    $region28: #{tpu_custom_call.1} parent=1 // pred_region
      %1210 = vsyncadd [#allocation3], 0
      %s1212 = sshll.u32 %s6, 4
      %s1213 = int_to_ptr.hbm [resolvable:$true] %s1212
      %1215 = dma.smem_to_hbm [#allocation2], 16, %s1213, [#allocation3]
    $region29: #{tpu_custom_call.1} parent=1 // pred_fallthru
      _
    // Predicated region
    $region30: #{tpu_custom_call.1} parent=1 // pred_check
      _
    $region31: #{tpu_custom_call.1} parent=1 // pred_check_branch
      %1217 = sbr.rel (0) target = $region33
    $region32: #{tpu_custom_call.1} parent=1 // pred_region
      %1219 = dma.done [#allocation3], 16
    $region33: #{tpu_custom_call.1} parent=1 // pred_fallthru
      _
    %1220 = sfence
    %1221 = vsyncpa [#allocation3], 1

</llo_original>
